<compile_context>
chip_gen: v5e
topology: v5e:2x2
jax: 0.10.0
libtpu: 0.0.40
codegen_flags: <defaults>
</compile_context>

<pallas_src>
import functools

import jax
import jax.numpy as jnp
from jax.experimental import pallas as pl
from jax.experimental.pallas import tpu as pltpu

_MIB = 1024 * 1024


@functools.lru_cache(maxsize=1)
def _vmem_capacity_bytes():
    """Best-effort per-TensorCore VMEM capacity; conservative fallback (v7x)."""
    try:
        cap = getattr(pltpu.get_tpu_info(), "vmem_capacity_bytes", None)
        if cap:
            return int(cap)
    except Exception:
        pass
    return 64 * _MIB


def _make_mean_kernel(R, tr, num_r):
    """Accumulate sum over the (tiled) reduce axis into an f32 scratch, then scale."""
    inv_r = 1.0 / float(R)
    last = num_r - 1
    rem = R - last * tr          # valid reduce rows in the final r block
    ragged = rem != tr

    def kernel(x_ref, o_ref, acc_ref):
        r = pl.program_id(2)

        @pl.when(r == 0)
        def _init():
            acc_ref[...] = jnp.zeros_like(acc_ref)

        if not ragged:
            # Hot path: upcast fused into the reduction -> no full-block f32 temp.
            acc_ref[...] += jnp.sum(x_ref[...], axis=1, dtype=jnp.float32)
        else:
            @pl.when(r != last)
            def _hot():
                acc_ref[...] += jnp.sum(x_ref[...], axis=1, dtype=jnp.float32)

            @pl.when(r == last)
            def _ragged_tail():
                # Mask only on the final step; iota kept tiny at (1, tr, 1).
                row = jax.lax.broadcasted_iota(jnp.int32, (1, tr, 1), 1)
                xv = jnp.where(row < rem, x_ref[...], jnp.zeros((), x_ref.dtype))
                acc_ref[...] += jnp.sum(xv, axis=1, dtype=jnp.float32)

        @pl.when(r == last)
        def _finalize():
            o_ref[...] = (acc_ref[...] * inv_r).astype(o_ref.dtype)

    return kernel


def _mean_over_axis1(x3, *, tb=None, tr=None, tn=None,
                     min_pallas_bytes=4 * _MIB, vmem_limit_bytes=None):
    """x3: (B, R, N) -> (B, N): mean over axis 1 via a tiled Pallas kernel."""
    B, R, N = x3.shape
    itemsize = jnp.dtype(x3.dtype).itemsize

    # Small-input fast path: pallas_call launch + grid overhead dominates.
    if x3.size * itemsize < min_pallas_bytes:
        return jnp.mean(x3.astype(jnp.float32), axis=1).astype(x3.dtype)

    # Per-chip block budget: ~16 MiB input blocks on 128 MiB VMEM (v5e/v6e),
    # ~8 MiB on 64 MiB VMEM (v7x).  Double-buffered input stays well under limit.
    big_vmem = _vmem_capacity_bytes() >= 100 * _MIB
    block_budget = (16 if big_vmem else 8) * _MIB
    if vmem_limit_bytes is None:
        vmem_limit_bytes = (80 if big_vmem else 48) * _MIB

    # Batch rows per output tile: fill the output vreg sublanes.
    if tb is None:
        tb = min(B, 16 if itemsize < 4 else 8)
    # Lane (kept, HBM-contiguous) axis: wide tiles -> long contiguous DMA runs.
    if tn is None:
        tn = N if N <= 4096 else 4096
    # Reduce (sublane) axis: whatever of the block budget remains (multiple of 8).
    if tr is None:
        row_bytes = tb * tn * itemsize
        tr_budget = max(8, (block_budget // row_bytes) // 8 * 8)
        tr = R if R <= tr_budget else tr_budget

    # v7x has 2 TensorCores: make sure the "parallel" axes have >= 2 blocks when
    # the reduce axis is the only one with multiple steps.
    nb, nn, nr = pl.cdiv(B, tb), pl.cdiv(N, tn), pl.cdiv(R, tr)
    if nb * nn < 2 and nr >= 2:
        if N >= 256:
            tn = max(128, (N // 2) // 128 * 128)
        elif B >= 16:
            tb = 8
        # TODO(synk): else split R across cores (two partial sums + tiny combine).

    grid = (pl.cdiv(B, tb), pl.cdiv(N, tn), pl.cdiv(R, tr))
    kernel = _make_mean_kernel(R, tr, grid[2])

    return pl.pallas_call(
        kernel,
        out_shape=jax.ShapeDtypeStruct((B, N), x3.dtype),
        grid=grid,
        in_specs=[pl.BlockSpec((tb, tr, tn), lambda b, n, r: (b, r, n))],
        out_specs=pl.BlockSpec((tb, tn), lambda b, n, r: (b, n)),
        scratch_shapes=[pltpu.VMEM((tb, tn), jnp.float32)],
        compiler_params=pltpu.CompilerParams(
            dimension_semantics=("parallel", "parallel", "arbitrary"),
            vmem_limit_bytes=vmem_limit_bytes,
        ),
    )(x3)


def adaptive_pooler_forward(x, out_channel=1, output_shape=None, dense=False,
                            min_pallas_bytes=4 * _MIB):
    """JAX/Pallas equivalent of adaptive_pooler.forward (out_channel=1, dense=False)."""
    assert out_channel == 1 and not dense, "only default config implemented"
    if x.ndim == 3:
        # (B, S, D): transpose(1,2) + AdaptiveAvgPool1d(1) == mean over S
        pooled = _mean_over_axis1(x, min_pallas_bytes=min_pallas_bytes)   # (B, D)
        if output_shape is not None:
            pooled = pooled.reshape(x.shape[0], *output_shape)
        return pooled
    elif x.ndim == 4:
        b, c, h, w = x.shape
        x3 = x.reshape(b, c, h * w)                                       # reduce over C
        pooled = _mean_over_axis1(x3, min_pallas_bytes=min_pallas_bytes)  # (B, H*W)
        return pooled.reshape(b, h, w)
    else:
        raise ValueError("expected 3D or 4D input")


if __name__ == "__main__":
    key = jax.random.PRNGKey(0)
    k1, k2, k3, k4, k5 = jax.random.split(key, 5)

    # 4D case: (B, C, H, W) = (2, 4, 16, 16) -> output (2, 16, 16). Force Pallas path.
    x4 = jax.random.normal(k1, (2, 4, 16, 16), dtype=jnp.float32)
    out4 = jax.block_until_ready(adaptive_pooler_forward(x4, min_pallas_bytes=0))
    ref4 = jnp.mean(x4, axis=1)
    assert out4.shape == (2, 16, 16)
    assert jnp.allclose(out4, ref4, atol=1e-5, rtol=1e-5)

    # 3D case: (B, S, D) = (2, 8, 32) -> output (2, 32).
    x3 = jax.random.normal(k2, (2, 8, 32), dtype=jnp.float32)
    out3 = jax.block_until_ready(adaptive_pooler_forward(x3, min_pallas_bytes=0))
    ref3 = jnp.mean(x3, axis=1)
    assert out3.shape == (2, 32)
    assert jnp.allclose(out3, ref3, atol=1e-5, rtol=1e-5)

    # Ragged tiled reduction path (R=300, forced tr=128 -> last block masked).
    xr = jax.random.normal(k3, (3, 300, 256), dtype=jnp.float32)
    outr = jax.block_until_ready(_mean_over_axis1(xr, tr=128, min_pallas_bytes=0))
    refr = jnp.mean(xr, axis=1)
    assert outr.shape == (3, 256)
    assert jnp.allclose(outr, refr, atol=1e-5, rtol=1e-5)

    # Parallel-axis split heuristic path (grid would be (1,1,4) -> lane axis split).
    xp = jax.random.normal(k4, (1, 256, 512), dtype=jnp.float32)
    outp = jax.block_until_ready(_mean_over_axis1(xp, tr=64, min_pallas_bytes=0))
    refp = jnp.mean(xp, axis=1)
    assert outp.shape == (1, 512)
    assert jnp.allclose(outp, refp, atol=1e-5, rtol=1e-5)

    # bf16 path (fused f32 accumulation inside the reduction).
    xb = jax.random.normal(k5, (2, 16, 128), dtype=jnp.bfloat16)
    outb = jax.block_until_ready(adaptive_pooler_forward(xb, min_pallas_bytes=0))
    refb = jnp.mean(xb.astype(jnp.float32), axis=1)
    assert outb.shape == (2, 128)
    assert jnp.allclose(outb.astype(jnp.float32), refb, atol=1e-2, rtol=1e-2)

    print("KERNEL_OK")
</pallas_src>

<mosaic_0001>
module attributes {stable_mosaic.version = 11 : i64} {
  func.func @kernel(%arg0: i32, %arg1: i32, %arg2: i32, %arg3: memref<2x4x256xf32, #tpu.memory_space<vmem>>, %arg4: memref<2x256xf32, #tpu.memory_space<vmem>>, %arg5: memref<2x256xf32, #tpu.memory_space<vmem>>) attributes {dimension_semantics = [#tpu.dimension_semantics<parallel>, #tpu.dimension_semantics<parallel>, #tpu.dimension_semantics<arbitrary>], iteration_bounds = array<i64: 1, 1, 1>, scalar_prefetch = 0 : i64, scratch_operands = 1 : i64, tpu.core_type = #tpu.core_type<tc>, window_params = [{transform_indices = @transform_0, window_bounds = array<i64: 2, 4, 256>}, {transform_indices = @transform_1, window_bounds = array<i64: 2, 256>}]} {
    %c0_i32 = arith.constant 0 : i32
    %0 = arith.cmpi eq, %arg2, %c0_i32 : i32
    %1 = arith.extui %0 : i1 to i32
    %c0_i32_0 = arith.constant 0 : i32
    %2 = arith.cmpi ne, %1, %c0_i32_0 : i32
    scf.if %2 {
      %cst_9 = arith.constant 0.000000e+00 : f32
      %11 = vector.broadcast %cst_9 : f32 to vector<2x256xf32>
      %c0_10 = arith.constant 0 : index
      %c0_11 = arith.constant 0 : index
      %12 = vector.load %arg5[%c0_10, %c0_11] : memref<2x256xf32, #tpu.memory_space<vmem>>, vector<2x256xf32>
      tpu.vector_store %arg5[%c0_10, %c0_11], %11 {strides = array<i32>} : memref<2x256xf32, #tpu.memory_space<vmem>>, vector<2x256xf32>,
    } else {
    }
    %c0 = arith.constant 0 : index
    %c0_1 = arith.constant 0 : index
    %3 = vector.load %arg5[%c0, %c0_1] : memref<2x256xf32, #tpu.memory_space<vmem>>, vector<2x256xf32>
    %c0_2 = arith.constant 0 : index
    %c0_3 = arith.constant 0 : index
    %c0_4 = arith.constant 0 : index
    %4 = vector.load %arg3[%c0_2, %c0_3, %c0_4] : memref<2x4x256xf32, #tpu.memory_space<vmem>>, vector<2x4x256xf32>
    %cst = arith.constant dense<0.000000e+00> : vector<2x256xf32>
    %5 = vector.multi_reduction <add>, %4, %cst [1] : vector<2x4x256xf32> to vector<2x256xf32>
    %6 = arith.addf %3, %5 : vector<2x256xf32>
    %c0_5 = arith.constant 0 : index
    %c0_6 = arith.constant 0 : index
    %7 = vector.load %arg5[%c0_5, %c0_6] : memref<2x256xf32, #tpu.memory_space<vmem>>, vector<2x256xf32>
    tpu.vector_store %arg5[%c0_5, %c0_6], %6 {strides = array<i32>} : memref<2x256xf32, #tpu.memory_space<vmem>>, vector<2x256xf32>,
    %c0_i32_7 = arith.constant 0 : i32
    %8 = arith.cmpi eq, %arg2, %c0_i32_7 : i32
    %9 = arith.extui %8 : i1 to i32
    %c0_i32_8 = arith.constant 0 : i32
    %10 = arith.cmpi ne, %9, %c0_i32_8 : i32
    scf.if %10 {
      %c0_9 = arith.constant 0 : index
      %c0_10 = arith.constant 0 : index
      %11 = vector.load %arg5[%c0_9, %c0_10] : memref<2x256xf32, #tpu.memory_space<vmem>>, vector<2x256xf32>
      %cst_11 = arith.constant 2.500000e-01 : f32
      %12 = vector.broadcast %cst_11 : f32 to vector<2x256xf32>
      %13 = arith.mulf %11, %12 : vector<2x256xf32>
      %c0_12 = arith.constant 0 : index
      %c0_13 = arith.constant 0 : index
      %14 = vector.load %arg4[%c0_12, %c0_13] : memref<2x256xf32, #tpu.memory_space<vmem>>, vector<2x256xf32>
      tpu.vector_store %arg4[%c0_12, %c0_13], %13 {strides = array<i32>} : memref<2x256xf32, #tpu.memory_space<vmem>>, vector<2x256xf32>,
    } else {
    }
    return
  }
  func.func @transform_0(%arg0: i32, %arg1: i32, %arg2: i32) -> (i32, i32, i32) {
    %c0_i32 = arith.constant 0 : i32
    return %arg0, %arg2, %arg1 : i32, i32, i32
  }
  func.func @transform_1(%arg0: i32, %arg1: i32, %arg2: i32) -> (i32, i32) {
    %c0_i32 = arith.constant 0 : i32
    return %arg0, %arg1 : i32, i32
  }
}

</mosaic_0001>

<llo_original>
// kernel: tpu_custom_call.1
$region0: #{tpu_custom_call.1}
  #allocation0 [shape = 'u32[]', space=smem, size = 0x4, offset = 0x4, fixed_abs, tag = 'smem constant byte address 0x4 - core index']
  #allocation1 [shape = 'u32[72,128]{1,0:T(1,128)}', space=vmem, size = 0x9000, scoped, tag = 'internal scratch']
  #allocation2 [shape = 'f32[2,256]{1,0:T(2,128)}', space=vmem, size = 0x800, scoped, tag = 'scratch operand']
  %s0 = inlined_call_operand.hbm [shape: f32[2,4,256], index: 0, kind: input, shape index: {}]
  %s1 = inlined_call_operand.hbm [shape: f32[2,256], index: 1, kind: output, shape index: {}]
  %s2 = sld [smem:[#allocation0]]
  $region26: #{tpu_custom_call.1} parent=0
    _
  %s4 = ssub.s32 1, %s2
  %s5 = scalar_select 0, %s4, %s2
  $region1: #{tpu_custom_call.1} parent=0
    #allocation3 [shape = 'u8[8192]{0}', space=vmem, size = 0x2000, scoped, tag = 'input window, operand 0, single buffered']
    #allocation4 [shape = 's32[1]{0}', space=sflag, size = 0x4, scoped, tag = 'scoped memory for tpu_custom_call.1']
    #allocation5 [shape = 's32[1]{0}', space=sflag, size = 0x4, scoped, tag = 'scoped memory for tpu_custom_call.1']
    #allocation6 [shape = 'u8[2048]{0}', space=vmem, size = 0x800, scoped, tag = 'output window, operand 0, single buffered']
    %6 = vsyncpa [#allocation4], 0
    %7 = vsyncpa [#allocation5], 0
    // Predicated region
    $region2: #{tpu_custom_call.1} parent=1 // pred_check
      _
    $region3: #{tpu_custom_call.1} parent=1 // pred_check_branch
      %9 = sbr.rel (0) target = $region5
    $region4: #{tpu_custom_call.1} parent=1 // pred_region
      %11 = vsyncadd [#allocation4], 0
      %s12 = sshll.u32 %s0, 4
      %s13 = int_to_ptr.hbm [resolvable:$true] %s12
      %s14 = sshll.u32 [#allocation3], 4
      %s15 = int_to_ptr.vmem [resolvable:$true] %s14
      %20 = dma.hbm_to_vmem [thread:$0]  %s13, 256, %s15, [#allocation4], 128, 128, 8
    $region5: #{tpu_custom_call.1} parent=1 // pred_fallthru
      _
    // Predicated region
    $region6: #{tpu_custom_call.1} parent=1 // pred_check
      _
    $region7: #{tpu_custom_call.1} parent=1 // pred_check_branch
      %22 = sbr.rel (0) target = $region9
    $region8: #{tpu_custom_call.1} parent=1 // pred_region
      %24 = dma.done [#allocation4], 256
    $region9: #{tpu_custom_call.1} parent=1 // pred_fallthru
      _
    %p25 = scmp.eq.s32.totalorder 0, 0
    // Predicated region
    $region10: #{tpu_custom_call.1} parent=1 // pred_check
      %p26 = pneg %p25
    $region11: #{tpu_custom_call.1} parent=1 // pred_check_branch
      %28 = sbr.rel (%p26) target = $region13
    $region12: #{tpu_custom_call.1} parent=1 // pred_region
      %29 = vst [vmem:[#allocation2] sm:$0xf] 0.0
    $region13: #{tpu_custom_call.1} parent=1 // pred_fallthru
      _
    %v30 = vld [vmem:[#allocation2] sm:$0xf]
    %v31 = vld [vmem:[#allocation3] sm:$0xff]
    %v32 = vld [vmem:[#allocation3 + $0x8] sm:$0xff]
    %35 = vst [vmem:[#allocation1] ss:$2 sm:$0xff] %v31
    %v36 = vld.sshfl [vmem:[#allocation1] sm:$0xff pattern:$0x75316420]
    %v37 = vld.sshfl [vmem:[#allocation1 + $0x8] sm:$0xff pattern:$0x75316420]
    %s38 = scalar_lea.vmem [#allocation1], 16
    %39 = vst [vmem:[%s38] ss:$2 sm:$0xff] %v32
    %v40 = vld.sshfl [vmem:[#allocation1 + $0x10] sm:$0xff pattern:$0x75316420]
    %v41 = vld.sshfl [vmem:[#allocation1 + $0x18] sm:$0xff pattern:$0x75316420]
    %vm46 = vcmask 1043456
    %v47 = vsel %vm46, %v36, 0.0
    %v48 = vrot.slane %v47, 4
    %v49 = vadd.f32 %v47, %v48
    %v50 = vrot.slane %v49, 2
    %v51 = vadd.f32 %v49, %v50
    %v52 = vrot.slane %v51, 1
    %v53 = vadd.f32 %v51, %v52
    %v54 = vsel %vm46, %v37, 0.0
    %v55 = vrot.slane %v54, 4
    %v56 = vadd.f32 %v54, %v55
    %v57 = vrot.slane %v56, 2
    %v58 = vadd.f32 %v56, %v57
    %v59 = vrot.slane %v58, 1
    %v60 = vadd.f32 %v58, %v59
    %v61 = vsel %vm46, %v40, 0.0
    %v62 = vrot.slane %v61, 4
    %v63 = vadd.f32 %v61, %v62
    %v64 = vrot.slane %v63, 2
    %v65 = vadd.f32 %v63, %v64
    %v66 = vrot.slane %v65, 1
    %v67 = vadd.f32 %v65, %v66
    %v68 = vsel %vm46, %v41, 0.0
    %v69 = vrot.slane %v68, 4
    %v70 = vadd.f32 %v68, %v69
    %v71 = vrot.slane %v70, 2
    %v72 = vadd.f32 %v70, %v71
    %v73 = vrot.slane %v72, 1
    %v74 = vadd.f32 %v72, %v73
    %v79 = vrot.slane %v60, 6
    %v80 = vrot.slane %v74, 6
    %vm81 = vcmask 1041408
    %v82 = vsel %vm81, %v53, %v79
    %v83 = vsel %vm81, %v67, %v80
    %vm84 = vcmask 1044484
    %v85 = vsel %vm84, %v82, %v82
    %vm86 = vcmask 1046534
    %v87 = vsel %vm86, %v82, %v85
    %v88 = vrot.slane %v83, 7
    %vm89 = vcmask 1041409
    %v90 = vsel %vm89, %v88, %v87
    %vm91 = vcmask 1043459
    %v92 = vsel %vm91, %v88, %v90
    %vm93 = vcmask 1045509
    %v94 = vsel %vm93, %v88, %v92
    %vm95 = vcmask 1047559
    %v96 = vsel %vm95, %v88, %v94
    %v98 = vadd.f32 %v30, %v96
    %99 = vst [vmem:[#allocation2] sm:$0xf] %v98
    // Predicated region
    $region14: #{tpu_custom_call.1} parent=1 // pred_check
      %p100 = pneg %p25
    $region15: #{tpu_custom_call.1} parent=1 // pred_check_branch
      %102 = sbr.rel (%p100) target = $region17
    $region16: #{tpu_custom_call.1} parent=1 // pred_region
      %v103 = vld [vmem:[#allocation2] sm:$0xf]
      %v104 = vmul.f32 %v103, 0.25
      %105 = vst [vmem:[#allocation6] sm:$0xf] %v104
    $region17: #{tpu_custom_call.1} parent=1 // pred_fallthru
      _
    // Predicated region
    $region18: #{tpu_custom_call.1} parent=1 // pred_check
      _
    $region19: #{tpu_custom_call.1} parent=1 // pred_check_branch
      %107 = sbr.rel (0) target = $region21
    $region20: #{tpu_custom_call.1} parent=1 // pred_region
      %109 = vsyncadd [#allocation5], 0
      %s111 = sshll.u32 [#allocation6], 4
      %s112 = int_to_ptr.vmem [resolvable:$true] %s111
      %s113 = sshll.u32 %s1, 4
      %s114 = int_to_ptr.hbm [resolvable:$true] %s113
      %116 = dma.vmem_to_hbm [thread:$0]  %s112, 64, %s114, [#allocation5]
    $region21: #{tpu_custom_call.1} parent=1 // pred_fallthru
      _
    // Predicated region
    $region22: #{tpu_custom_call.1} parent=1 // pred_check
      _
    $region23: #{tpu_custom_call.1} parent=1 // pred_check_branch
      %118 = sbr.rel (0) target = $region25
    $region24: #{tpu_custom_call.1} parent=1 // pred_region
      %120 = dma.done [#allocation5], 64
    $region25: #{tpu_custom_call.1} parent=1 // pred_fallthru
      _
    %121 = vsyncpa [#allocation4], 1
    %122 = vsyncpa [#allocation5], 1

</llo_original>
